<compile_context>
chip_gen: v5e
topology: v5e:2x2
jax: 0.10.0
libtpu: 0.0.40
codegen_flags: <defaults>
</compile_context>

<pallas_src>
import math

import jax
import jax.numpy as jnp
from jax.experimental import pallas as pl
from jax.experimental.pallas import tpu as pltpu


def _scaling_kernel(shift_ref, inv_ref, x_ref, o_ref):
    # shift_ref / inv_ref: (rb, 1) float32 per-row constants (channel pattern,
    # block-invariant because rb % C == 0 and every row block starts at a
    # multiple of C). x_ref / o_ref: (rb, cb) lane-dense data tiles.
    x = x_ref[...].astype(jnp.float32)
    o_ref[...] = ((x - shift_ref[...]) * inv_ref[...]).astype(o_ref.dtype)


def _round_up(x, m):
    return -(-x // m) * m


def scaling_layer(x, shift, scale, *, row_target=256, tile_bytes=4 << 20):
    """x: (N, C, H, W); shift/scale broadcastable to (1, C, 1, 1).
    Returns (x - shift) / scale with the same shape/dtype as x."""
    N, C, H, W = x.shape
    R, L = N * C, H * W
    itemsize = jnp.dtype(x.dtype).itemsize

    # --- row (sublane) block: dtype-aware alignment, multiple of C ----------
    sub_align = {4: 8, 2: 16, 1: 32}.get(itemsize, 8)
    row_align = sub_align * C // math.gcd(sub_align, C)  # lcm(sub_align, C)
    if R <= row_align:
        # Full-extent row block (always legal), avoids padded sublanes for the
        # small-R case (LPIPS: R = 3*N).
        rb = R
    else:
        rb = max(row_align, (row_target // row_align) * row_align)
        rb = min(rb, _round_up(R, row_align))

    # --- column (lane) block: multiple of 128, sized to ~tile_bytes ---------
    cb = max(128, ((tile_bytes // (rb * itemsize)) // 128) * 128)
    cb = min(cb, _round_up(L, 128))

    nr, nc = pl.cdiv(R, rb), pl.cdiv(L, cb)
    if nr * nc < 2 and L > 128:
        # Guarantee >=2 steps along a "parallel" axis so both v7x TCs get work.
        cb = _round_up(-(-L // 2), 128)
        nc = pl.cdiv(L, cb)

    # Per-row affine constants: only rb rows are needed (the channel pattern
    # repeats every C rows). Kept in float32 regardless of x.dtype.
    shift_c = jnp.asarray(shift, jnp.float32).reshape(C)
    inv_c = (1.0 / jnp.asarray(scale, jnp.float32)).reshape(C)
    shift_rows = jnp.tile(shift_c, rb // C).reshape(rb, 1)
    inv_rows = jnp.tile(inv_c, rb // C).reshape(rb, 1)

    x2 = x.reshape(R, L)  # lane-dense 2D view: rows = N*C, lanes = H*W

    out2 = pl.pallas_call(
        _scaling_kernel,
        out_shape=jax.ShapeDtypeStruct((R, L), x.dtype),
        grid_spec=pltpu.PrefetchScalarGridSpec(
            num_scalar_prefetch=0,
            grid=(nr, nc),
            in_specs=[
                pl.BlockSpec((rb, 1), lambda i, j: (0, 0)),   # per-row shift
                pl.BlockSpec((rb, 1), lambda i, j: (0, 0)),   # per-row 1/scale
                pl.BlockSpec((rb, cb), lambda i, j: (i, j)),  # x tile
            ],
            out_specs=pl.BlockSpec((rb, cb), lambda i, j: (i, j)),
        ),
        compiler_params=pltpu.CompilerParams(
            dimension_semantics=("parallel", "parallel"),
            vmem_limit_bytes=40 << 20,
        ),
        # TODO(synk): with caller-side buffer donation, input_output_aliases=
        # {2: 0} would let the result overwrite x in place (halves peak HBM
        # footprint); left off since this demo reuses x after the call.
    )(shift_rows, inv_rows, x2)

    return out2.reshape(N, C, H, W)


if __name__ == "__main__":
    # Fixed constants registered by the module (buffers, not learned weights).
    shift = jnp.array([-0.030, -0.088, -0.188], dtype=jnp.float32).reshape(1, 3, 1, 1)
    scale = jnp.array([0.458, 0.448, 0.450], dtype=jnp.float32).reshape(1, 3, 1, 1)

    k0, k1 = jax.random.split(jax.random.PRNGKey(0))

    # Small canonical shape (batch=2, C=3 fixed by the module, 16x16 spatial).
    x = jax.random.normal(k0, (2, 3, 16, 16), dtype=jnp.float32)
    out = jax.block_until_ready(scaling_layer(x, shift, scale))
    ref = (x - shift) / scale
    assert out.shape == ref.shape and out.dtype == ref.dtype
    assert jnp.allclose(out, ref, atol=1e-5, rtol=1e-5)

    # Ragged spatial size (H*W = 2500, not a multiple of 128) exercises the
    # masked edge blocks that replaced the old full-extent fallback.
    x2 = jax.random.normal(k1, (2, 3, 50, 50), dtype=jnp.float32)
    out2 = jax.block_until_ready(scaling_layer(x2, shift, scale))
    ref2 = (x2 - shift) / scale
    assert jnp.allclose(out2, ref2, atol=1e-5, rtol=1e-5)

    print("KERNEL_OK")
</pallas_src>

<mosaic_0001>
module attributes {stable_mosaic.version = 11 : i64} {
  func.func @_scaling_kernel(%arg0: i32, %arg1: i32, %arg2: memref<6x1xf32, #tpu.memory_space<vmem>>, %arg3: memref<6x1xf32, #tpu.memory_space<vmem>>, %arg4: memref<6x128xf32, #tpu.memory_space<vmem>>, %arg5: memref<6x128xf32, #tpu.memory_space<vmem>>) attributes {dimension_semantics = [#tpu.dimension_semantics<parallel>, #tpu.dimension_semantics<parallel>], iteration_bounds = array<i64: 1, 2>, scalar_prefetch = 0 : i64, scratch_operands = 0 : i64, tpu.core_type = #tpu.core_type<tc>, window_params = [{pipeline_mode = #tpu.pipeline_mode<synchronous>, transform_indices = @transform_0, window_bounds = array<i64: 6, 1>}, {pipeline_mode = #tpu.pipeline_mode<synchronous>, transform_indices = @transform_1, window_bounds = array<i64: 6, 1>}, {transform_indices = @transform_2, window_bounds = array<i64: 6, 128>}, {transform_indices = @transform_3, window_bounds = array<i64: 6, 128>}]} {
    %c0 = arith.constant 0 : index
    %c0_0 = arith.constant 0 : index
    %0 = vector.load %arg4[%c0, %c0_0] : memref<6x128xf32, #tpu.memory_space<vmem>>, vector<6x128xf32>
    %c0_1 = arith.constant 0 : index
    %c0_2 = arith.constant 0 : index
    %1 = vector.load %arg2[%c0_1, %c0_2] : memref<6x1xf32, #tpu.memory_space<vmem>>, vector<6x1xf32>
    %2 = vector.broadcast %1 : vector<6x1xf32> to vector<6x128xf32>
    %3 = arith.subf %0, %2 : vector<6x128xf32>
    %c0_3 = arith.constant 0 : index
    %c0_4 = arith.constant 0 : index
    %4 = vector.load %arg3[%c0_3, %c0_4] : memref<6x1xf32, #tpu.memory_space<vmem>>, vector<6x1xf32>
    %5 = vector.broadcast %4 : vector<6x1xf32> to vector<6x128xf32>
    %6 = arith.mulf %3, %5 : vector<6x128xf32>
    %c0_5 = arith.constant 0 : index
    %c0_6 = arith.constant 0 : index
    %7 = vector.load %arg5[%c0_5, %c0_6] : memref<6x128xf32, #tpu.memory_space<vmem>>, vector<6x128xf32>
    tpu.vector_store %arg5[%c0_5, %c0_6], %6 {strides = array<i32>} : memref<6x128xf32, #tpu.memory_space<vmem>>, vector<6x128xf32>,
    return
  }
  func.func @transform_0(%arg0: i32, %arg1: i32) -> (i32, i32) {
    %c0_i32 = arith.constant 0 : i32
    %c0_i32_0 = arith.constant 0 : i32
    %c0_i32_1 = arith.constant 0 : i32
    return %c0_i32, %c0_i32_0 : i32, i32
  }
  func.func @transform_1(%arg0: i32, %arg1: i32) -> (i32, i32) {
    %c0_i32 = arith.constant 0 : i32
    %c0_i32_0 = arith.constant 0 : i32
    %c0_i32_1 = arith.constant 0 : i32
    return %c0_i32, %c0_i32_0 : i32, i32
  }
  func.func @transform_2(%arg0: i32, %arg1: i32) -> (i32, i32) {
    %c0_i32 = arith.constant 0 : i32
    return %arg0, %arg1 : i32, i32
  }
  func.func @transform_3(%arg0: i32, %arg1: i32) -> (i32, i32) {
    %c0_i32 = arith.constant 0 : i32
    return %arg0, %arg1 : i32, i32
  }
}

</mosaic_0001>

<llo_original>
// kernel: tpu_custom_call.1
$region0: #{tpu_custom_call.1}
  #allocation0 [shape = 'u32[]', space=smem, size = 0x4, offset = 0x4, fixed_abs, tag = 'smem constant byte address 0x4 - core index']
  #allocation1 [shape = 'u32[72,128]{1,0:T(1,128)}', space=vmem, size = 0x9000, scoped, tag = 'internal scratch']
  %s0 = inlined_call_operand.vmem [shape: f32[6,1], index: 0, kind: input, shape index: {}]
  %s1 = inlined_call_operand.vmem [shape: f32[6,1], index: 1, kind: input, shape index: {}]
  %s2 = inlined_call_operand.vmem [shape: f32[6,256], index: 2, kind: input, shape index: {}]
  %s3 = inlined_call_operand.hbm [shape: f32[6,256], index: 3, kind: output, shape index: {}]
  %s4 = sld [smem:[#allocation0]]
  $region45: #{tpu_custom_call.1} parent=0
    _
  %s6 = ssub.s32 1, %s4
  %s7 = scalar_select 0, %s6, %s4
  $region1: #{tpu_custom_call.1} parent=0
    #allocation2 [shape = 'u8[8192]{0}', space=vmem, size = 0x2000, scoped, tag = 'output window, operand 0']
    #allocation3 [shape = 's32[2]{0}', space=sflag, size = 0x8, scoped, tag = 'scoped memory for tpu_custom_call.1']
    %8 = vsyncpa [#allocation3], 0
    %s9 = scalar_lea.sflag [#allocation3], 1
    %10 = vsyncpa %s9, 0
    loop: start=0, step=1, limit=4
    $region2: #{tpu_custom_call.1} parent=1 // loop_pre_header
      _
    $region3: #{tpu_custom_call.1} parent=1 // loop_header
      %s12 = sphi 0, %s16
      %p13 = scmp.ge.s32.totalorder %s12, 4
      %s19 = sphi 0, %s31
      %s20 = sphi 0, %s27
      %s21 = sphi 0, %s19
      %s22 = sphi 0, %s20
      %s23 = sphi 0, %s21
      %s24 = sphi 0, %s22
      %s32 = sphi 0, %s32
      %s34 = sphi 0, %s32
      %s35 = sphi 0, %s34
      %s49 = sphi 0, %s35
      %s53 = sphi 0, %s53
      %s55 = sphi 0, %s53
      %s56 = sphi 0, %s55
      %s70 = sphi 0, %s56
      %s78 = sphi 0, %s80
      %s81 = sphi 0, %s78
      %s82 = sphi 0, %s81
      %s98 = sphi 0, %s82
      %s106 = sphi 0, %s108
      %s109 = sphi 0, %s106
      %s110 = sphi 0, %s109
      %s126 = sphi 0, %s110
    $region4: #{tpu_custom_call.1} parent=1 // loop_header_branch
      %15 = sbr.rel (%p13) target = $region8
    $region5: #{tpu_custom_call.1} parent=1 // loop_body
      %s17 = ssub.s32 %s12, 1
      %s18 = ssub.s32 %s12, 2
      %s25 = sadd.s32 1, %s20
      %p26 = scmp.ge.s32.totalorder %s25, 2
      %s27 = scalar_select %p26, 0, %s25
      %s28 = sadd.s32 1, %s19
      %s29 = scalar_select %p26, %s28, %s19
      %p30 = scmp.ge.s32.totalorder %s29, 1
      %s31 = scalar_select %p30, 0, %s29
      %s33 = sadd.s32 %s32, 1
      %p36 = scmp.eq.s32.totalorder %s12, 1
      %p37 = scmp.ne.s32.totalorder %s32, %s34
      %p38 = scmp.eq.s32.totalorder %s12, 0
      %p39 = por %p37, %p38
      %p40 = scmp.ne.s32.totalorder %s32, %s34
      %p41 = scmp.eq.s32.totalorder %s17, 1
      %p42 = por %p40, %p41
      %p43 = scmp.ne.s32.totalorder %s34, %s35
      %p44 = scmp.eq.s32.totalorder %s17, 0
      %p45 = por %p43, %p44
      %p46 = scmp.ne.s32.totalorder %s34, %s35
      %p47 = scmp.eq.s32.totalorder %s18, 1
      %p48 = por %p46, %p47
      %p50 = scmp.ne.s32.totalorder %s35, %s49
      %p51 = scmp.eq.s32.totalorder %s18, 0
      %p52 = por %p50, %p51
      %s54 = sadd.s32 %s53, 1
      %p57 = scmp.eq.s32.totalorder %s12, 1
      %p58 = scmp.ne.s32.totalorder %s53, %s55
      %p59 = scmp.eq.s32.totalorder %s12, 0
      %p60 = por %p58, %p59
      %p61 = scmp.ne.s32.totalorder %s53, %s55
      %p62 = scmp.eq.s32.totalorder %s17, 1
      %p63 = por %p61, %p62
      %p64 = scmp.ne.s32.totalorder %s55, %s56
      %p65 = scmp.eq.s32.totalorder %s17, 0
      %p66 = por %p64, %p65
      %p67 = scmp.ne.s32.totalorder %s55, %s56
      %p68 = scmp.eq.s32.totalorder %s18, 1
      %p69 = por %p67, %p68
      %p71 = scmp.ne.s32.totalorder %s56, %s70
      %p72 = scmp.eq.s32.totalorder %s18, 0
      %p73 = por %p71, %p72
      %s74 = ssub.s32 %s19, %s31
      %s75 = ssub.s32 %s20, %s27
      %s76 = sor.u32 %s74, %s75
      %p77 = scmp.eq.s32.totalorder %s76, 0
      %s79 = sadd.s32 %s78, 1
      %s80 = scalar_select %p77, %s78, %s79
      %p83 = pneg %p77
      %p84 = scmp.eq.s32.totalorder %s12, 1
      %p85 = por %p83, %p84
      %p86 = scmp.ne.s32.totalorder %s78, %s81
      %p87 = scmp.eq.s32.totalorder %s12, 0
      %p88 = por %p86, %p87
      %p89 = scmp.ne.s32.totalorder %s78, %s81
      %p90 = scmp.eq.s32.totalorder %s17, 1
      %p91 = por %p89, %p90
      %p92 = scmp.ne.s32.totalorder %s81, %s82
      %p93 = scmp.eq.s32.totalorder %s17, 0
      %p94 = por %p92, %p93
      %p95 = scmp.ne.s32.totalorder %s81, %s82
      %p96 = scmp.eq.s32.totalorder %s18, 1
      %p97 = por %p95, %p96
      %p99 = scmp.ne.s32.totalorder %s82, %s98
      %p100 = scmp.eq.s32.totalorder %s18, 0
      %p101 = por %p99, %p100
      %s102 = ssub.s32 %s19, %s31
      %s103 = ssub.s32 %s20, %s27
      %s104 = sor.u32 %s102, %s103
      %p105 = scmp.eq.s32.totalorder %s104, 0
      %s107 = sadd.s32 %s106, 1
      %s108 = scalar_select %p105, %s106, %s107
      %p111 = pneg %p105
      %p112 = scmp.eq.s32.totalorder %s12, 1
      %p113 = por %p111, %p112
      %p114 = scmp.ne.s32.totalorder %s106, %s109
      %p115 = scmp.eq.s32.totalorder %s12, 0
      %p116 = por %p114, %p115
      %p117 = scmp.ne.s32.totalorder %s106, %s109
      %p118 = scmp.eq.s32.totalorder %s17, 1
      %p119 = por %p117, %p118
      %p120 = scmp.ne.s32.totalorder %s109, %s110
      %p121 = scmp.eq.s32.totalorder %s17, 0
      %p122 = por %p120, %p121
      %p123 = scmp.ne.s32.totalorder %s109, %s110
      %p124 = scmp.eq.s32.totalorder %s18, 1
      %p125 = por %p123, %p124
      %p127 = scmp.ne.s32.totalorder %s110, %s126
      %p128 = scmp.eq.s32.totalorder %s18, 0
      %p129 = por %p127, %p128
      %p130 = scmp.le.s32.totalorder 1, %s12
      %p131 = scmp.lt.s32.totalorder %s12, 3
      %p132 = pnand %p130, %p131
      %p133 = pneg %p132
      // Predicated region
      $region9: #{tpu_custom_call.1} parent=5 // pred_check
        _
      $region10: #{tpu_custom_call.1} parent=5 // pred_check_branch
        %135 = sbr.rel (%p132) target = $region12
      $region11: #{tpu_custom_call.1} parent=5 // pred_region
        %s136 = ssub.s32 %s12, 1
        // Predicated region
        $region13: #{tpu_custom_call.1} parent=11 // pred_check
          %p137 = pneg %p45
        $region14: #{tpu_custom_call.1} parent=11 // pred_check_branch
          %139 = sbr.rel (%p137) target = $region16
        $region15: #{tpu_custom_call.1} parent=11 // pred_region
          _
        $region16: #{tpu_custom_call.1} parent=11 // pred_fallthru
          _
        // Predicated region
        $region17: #{tpu_custom_call.1} parent=11 // pred_check
          %p140 = pneg %p66
        $region18: #{tpu_custom_call.1} parent=11 // pred_check_branch
          %142 = sbr.rel (%p140) target = $region20
        $region19: #{tpu_custom_call.1} parent=11 // pred_region
          _
        $region20: #{tpu_custom_call.1} parent=11 // pred_fallthru
          _
      $region12: #{tpu_custom_call.1} parent=5 // pred_fallthru
        _
      %p143 = scmp.lt.s32.totalorder %s12, 2
      // Predicated region
      $region21: #{tpu_custom_call.1} parent=5 // pred_check
        %p144 = pneg %p143
      $region22: #{tpu_custom_call.1} parent=5 // pred_check_branch
        %146 = sbr.rel (%p144) target = $region24
      $region23: #{tpu_custom_call.1} parent=5 // pred_region
        // Predicated region
        $region25: #{tpu_custom_call.1} parent=23 // pred_check
          %p147 = pneg %p88
        $region26: #{tpu_custom_call.1} parent=23 // pred_check_branch
          %149 = sbr.rel (%p147) target = $region28
        $region27: #{tpu_custom_call.1} parent=23 // pred_region
          %p150 = scmp.lt.s32.totalorder %s19, 0
          %s151 = scalar_select %p150, %s19, 0
          %p152 = scmp.lt.s32.totalorder %s20, 1
          %s153 = scalar_select %p152, %s20, 1
          %s154 = smul.addr %s151, 2
          %s155 = sadd.s32 %s153, %s154
          %s156 = smul.addr %s155, 8
          %s157 = scalar_lea.vmem %s2, %s156
        $region28: #{tpu_custom_call.1} parent=23 // pred_fallthru
          _
      $region24: #{tpu_custom_call.1} parent=5 // pred_fallthru
        _
      %p158 = scmp.le.s32.totalorder 1, %s12
      %p159 = scmp.lt.s32.totalorder %s12, 3
      %p160 = pnand %p158, %p159
      %p161 = pneg %p160
      // Predicated region
      $region29: #{tpu_custom_call.1} parent=5 // pred_check
        _
      $region30: #{tpu_custom_call.1} parent=5 // pred_check_branch
        %163 = sbr.rel (%p160) target = $region32
      $region31: #{tpu_custom_call.1} parent=5 // pred_region
        %s164 = ssub.s32 %s12, 1
        %p165 = pneg %p45
        %p166 = pneg %p42
        %p167 = pneg %p66
        %p168 = pneg %p63
        %p169 = scmp.lt.s32.totalorder %s21, 0
        %s170 = scalar_select %p169, %s21, 0
        %p171 = scmp.lt.s32.totalorder %s22, 1
        %s172 = scalar_select %p171, %s22, 1
        %s173 = smul.addr %s170, 2
        %s174 = sadd.s32 %s172, %s173
        %s175 = smul.addr %s174, 8
        %s176 = scalar_lea.vmem %s2, %s175
        %p177 = pneg %p94
        %p178 = pneg %p91
        %p179 = pneg %p122
        %p180 = pneg %p119
        %s181 = sand.u32 %s109, 1
        %s182 = scalar_lea.sflag [#allocation3], %s181
        %s183 = sand.u32 %s109, 1
        %s184 = smul.addr %s183, 8
        %s185 = scalar_lea.vmem [#allocation2], %s184
        %p186 = scmp.lt.s32.totalorder %s21, 0
        %s187 = scalar_select %p186, %s21, 0
        %p188 = scmp.lt.s32.totalorder %s22, 1
        %s189 = scalar_select %p188, %s22, 1
        %s190 = smul.addr %s187, 2
        %s191 = sadd.s32 %s189, %s190
        %s192 = smul.addr %s191, 8
        %s193 = scalar_lea.vmem %s2, %s192
        %v194 = vld [vmem:[%s193] sm:$0x3f]
        %v195 = vld [vmem:[%s0] sm:$0x3f]
        %197 = vset.pattern.permute.xlu0 0
        %198 = vperm.xlu0 %197, %v195
        %v199 = vpop.permute.xlu0 %198
        %v201 = vsub.f32 %v194, %v199
        %v202 = vld [vmem:[%s1] sm:$0x3f]
        %204 = vset.pattern.permute.xlu0 0
        %205 = vperm.xlu0 %204, %v202
        %v206 = vpop.permute.xlu0 %205
        %v208 = vmul.f32 %v201, %v206
        %209 = vst [vmem:[%s185] sm:$0x3f] %v208
        %s210 = sand.u32 %s109, 1
        %s211 = scalar_lea.sflag [#allocation3], %s210
        %s212 = sand.u32 %s109, 1
        %s213 = smul.addr %s212, 8
        %s214 = scalar_lea.vmem [#allocation2], %s213
        // Predicated region
        $region33: #{tpu_custom_call.1} parent=31 // pred_check
          %p215 = pneg %p119
        $region34: #{tpu_custom_call.1} parent=31 // pred_check_branch
          %217 = sbr.rel (%p215) target = $region36
        $region35: #{tpu_custom_call.1} parent=31 // pred_region
          %219 = vsyncadd %s211, 0
          %s220 = smul.addr %s21, 2
          %s221 = sadd.s32 %s22, %s220
          %s222 = smul.addr %s221, 8
          %s223 = scalar_lea.hbm %s3, %s222
          %s225 = sshll.u32 %s214, 4
          %s226 = int_to_ptr.vmem [resolvable:$true] %s225
          %s227 = sshll.u32 %s223, 4
          %s228 = int_to_ptr.hbm [resolvable:$true] %s227
          %230 = dma.vmem_to_hbm [thread:$0]  %s226, 128, %s228, %s211
        $region36: #{tpu_custom_call.1} parent=31 // pred_fallthru
          _
      $region32: #{tpu_custom_call.1} parent=5 // pred_fallthru
        _
      %p231 = scmp.le.s32.totalorder 2, %s12
      // Predicated region
      $region37: #{tpu_custom_call.1} parent=5 // pred_check
        %p232 = pneg %p231
      $region38: #{tpu_custom_call.1} parent=5 // pred_check_branch
        %234 = sbr.rel (%p232) target = $region40
      $region39: #{tpu_custom_call.1} parent=5 // pred_region
        %s235 = ssub.s32 %s12, 2
        // Predicated region
        $region41: #{tpu_custom_call.1} parent=39 // pred_check
          %p236 = pneg %p125
        $region42: #{tpu_custom_call.1} parent=39 // pred_check_branch
          %238 = sbr.rel (%p236) target = $region44
        $region43: #{tpu_custom_call.1} parent=39 // pred_region
          %s239 = sand.u32 %s110, 1
          %s240 = scalar_lea.sflag [#allocation3], %s239
          %s241 = sand.u32 %s110, 1
          %s242 = smul.addr %s241, 8
          %s243 = scalar_lea.vmem [#allocation2], %s242
          %245 = dma.done %s240, 128
        $region44: #{tpu_custom_call.1} parent=39 // pred_fallthru
          _
      $region40: #{tpu_custom_call.1} parent=5 // pred_fallthru
        _
    $region6: #{tpu_custom_call.1} parent=1 // loop_footer
      %s16 = sadd.s32 1, %s12
    $region7: #{tpu_custom_call.1} parent=1 // loop_footer_branch
      %11 = sbr.rel target = $region3
    $region8: #{tpu_custom_call.1} parent=1 // loop_exit
      _
    %246 = vsyncpa [#allocation3], 1
    %s247 = scalar_lea.sflag [#allocation3], 1
    %248 = vsyncpa %s247, 1

</llo_original>
